<compile_context>
chip_gen: v7x
topology: tpu7x:2x2x1
jax: 0.10.0
libtpu: 0.0.40
codegen_flags: <defaults>
</compile_context>

<pallas_src>
import functools
import math

import jax
import jax.numpy as jnp
from jax import lax
from jax.experimental import pallas as pl
from jax.experimental.pallas import tpu as pltpu

H_PAD = 128   # hidden width zero-padded to a full 128-lane vreg
SUB = 8       # sublane rows of the packed (transposed) output tile
SMALL_N = 512 # below this, a single grid step (launch-bound regime)


def _round_up(x, m):
    return ((x + m - 1) // m) * m


def aggregation_kernel(x_ref, w1_ref, b1_ref, w2_ref, b2_ref, o_ref):
    # x_ref : (tm, E)       input row tile
    # w1_ref: (E, H_PAD)    first linear weight, zero-padded columns
    # b1_ref: (1, H_PAD)    first linear bias, zero-padded
    # w2_ref: (SUB, H_PAD)  gate weight; only sublane row 0 is real
    # b2_ref: (SUB, 1)      gate bias; only row 0 is real
    # o_ref : (SUB, tm)     packed transposed output; row 0 holds the result
    h = jnp.dot(x_ref[...], w1_ref[...], preferred_element_type=jnp.float32)
    h = jnp.maximum(h + b1_ref[...], 0.0)                           # ReLU
    # (SUB, H_PAD) contracted with (tm, H_PAD) over H_PAD -> (SUB, tm).
    # Padded hidden lanes are exactly 0 after ReLU, so they contribute nothing.
    g = lax.dot_general(w2_ref[...], h, (((1,), (1,)), ((), ())),
                        preferred_element_type=jnp.float32)
    g = g + b2_ref[...]
    # exp() runs on the EUP; the kernel is HBM-bound so the exact divide is free.
    o_ref[...] = (1.0 / (1.0 + jnp.exp(-g))).astype(o_ref.dtype)    # sigmoid


def prepare_aggregation_params(w1, b1, w2, b2):
    """One-time weight plumbing (padding / layout); hoisted out of the hot path."""
    E, H = w1.shape
    w1p = jnp.zeros((E, H_PAD), jnp.float32).at[:, :H].set(w1.astype(jnp.float32))
    b1p = jnp.zeros((1, H_PAD), jnp.float32).at[:, :H].set(
        b1.astype(jnp.float32).reshape(1, H))
    w2p = jnp.zeros((SUB, H_PAD), jnp.float32).at[0, :H].set(
        w2.astype(jnp.float32).reshape(H))
    b2p = jnp.zeros((SUB, 1), jnp.float32).at[0, 0].set(
        b2.astype(jnp.float32).reshape(()))
    return (w1p, b1p, w2p, b2p)


@functools.partial(jax.jit, static_argnames=("tm",))
def aggregation_forward(seqs, params, *, tm=2048):
    """sigmoid(relu(seqs @ w1 + b1) @ w2 + b2), fused in one Pallas kernel.

    seqs: [..., E]; params from prepare_aggregation_params. Returns [..., 1].
    """
    w1p, b1p, w2p, b2p = params
    lead_shape = seqs.shape[:-1]
    E = seqs.shape[-1]

    x = seqs.reshape(-1, E).astype(jnp.float32)
    N = x.shape[0]

    # Row tile: sublane-aligned, no input padding (edge block reads partially).
    n_al = _round_up(max(N, 1), SUB)
    if n_al <= SMALL_N:
        tm_eff = n_al                                     # single launch-bound step
    else:
        # >= 2 grid steps (v7x megacore) and a lane-dense (mult-of-128) tile.
        tm_eff = max(128, min(tm, _round_up(pl.cdiv(n_al, 2), 128)))
    grid0 = pl.cdiv(n_al, tm_eff)
    n_out = grid0 * tm_eff   # output padded to whole tiles -> every store is full

    out_packed = pl.pallas_call(
        aggregation_kernel,
        out_shape=jax.ShapeDtypeStruct((SUB, n_out), jnp.float32),
        grid_spec=pltpu.PrefetchScalarGridSpec(
            num_scalar_prefetch=0,
            grid=(grid0,),
            in_specs=[
                pl.BlockSpec((tm_eff, E), lambda i: (i, 0)),     # input row tile
                pl.BlockSpec((E, H_PAD), lambda i: (0, 0)),      # W1 (padded)
                pl.BlockSpec((1, H_PAD), lambda i: (0, 0)),      # b1 (padded)
                pl.BlockSpec((SUB, H_PAD), lambda i: (0, 0)),    # W2 (row 0 real)
                pl.BlockSpec((SUB, 1), lambda i: (0, 0)),        # b2 (row 0 real)
            ],
            out_specs=pl.BlockSpec((SUB, tm_eff), lambda i: (0, i)),
        ),
        compiler_params=pltpu.CompilerParams(
            dimension_semantics=("parallel",)),
    )(x, w1p, b1p, w2p, b2p)

    out = out_packed[0, :N]                 # row 0 = real gate output
    return out.reshape(*lead_shape, 1)


if __name__ == "__main__":
    # Small shapes consistent with the module: batch=2, seq=8, embedding_size=64.
    B, S, E, H = 2, 8, 64, 32

    key = jax.random.PRNGKey(0)
    k_x, k_w1, k_b1, k_w2, k_b2 = jax.random.split(key, 5)

    seqs = jax.random.normal(k_x, (B, S, E), jnp.float32)

    # PyTorch nn.Linear-style init: U(-1/sqrt(fan_in), 1/sqrt(fan_in)).
    s1 = 1.0 / math.sqrt(E)
    w1 = jax.random.uniform(k_w1, (E, H), jnp.float32, -s1, s1)
    b1 = jax.random.uniform(k_b1, (H,), jnp.float32, -s1, s1)
    s2 = 1.0 / math.sqrt(H)
    w2 = jax.random.uniform(k_w2, (H, 1), jnp.float32, -s2, s2)
    b2 = jax.random.uniform(k_b2, (1,), jnp.float32, -s2, s2)

    params = prepare_aggregation_params(w1, b1, w2, b2)   # one-time plumbing
    out = aggregation_forward(seqs, params)
    out = jax.block_until_ready(out)

    # Pure-JAX reference.
    h_ref = jnp.maximum(seqs @ w1 + b1, 0.0)
    ref = jax.nn.sigmoid(h_ref @ w2 + b2)

    assert out.shape == (B, S, 1), out.shape
    # Tolerance covers MXU f32-via-bf16-pass matmul precision.
    assert jnp.allclose(out, ref, atol=2e-3, rtol=0.0), "mismatch vs reference"

    print("KERNEL_OK")
</pallas_src>

<mosaic_0001>
module attributes {stable_mosaic.version = 11 : i64} {
  func.func @aggregation_kernel(%arg0: i32, %arg1: memref<16x64xf32, #tpu.memory_space<vmem>>, %arg2: memref<64x128xf32, #tpu.memory_space<vmem>>, %arg3: memref<1x128xf32, #tpu.memory_space<vmem>>, %arg4: memref<8x128xf32, #tpu.memory_space<vmem>>, %arg5: memref<8x1xf32, #tpu.memory_space<vmem>>, %arg6: memref<8x16xf32, #tpu.memory_space<vmem>>) attributes {dimension_semantics = [#tpu.dimension_semantics<parallel>], iteration_bounds = array<i64: 1>, scalar_prefetch = 0 : i64, scratch_operands = 0 : i64, tpu.core_type = #tpu.core_type<tc>, window_params = [{transform_indices = @transform_0, window_bounds = array<i64: 16, 64>}, {pipeline_mode = #tpu.pipeline_mode<synchronous>, transform_indices = @transform_1, window_bounds = array<i64: 64, 128>}, {pipeline_mode = #tpu.pipeline_mode<synchronous>, transform_indices = @transform_2, window_bounds = array<i64: 1, 128>}, {pipeline_mode = #tpu.pipeline_mode<synchronous>, transform_indices = @transform_3, window_bounds = array<i64: 8, 128>}, {pipeline_mode = #tpu.pipeline_mode<synchronous>, transform_indices = @transform_4, window_bounds = array<i64: 8, 1>}, {transform_indices = @transform_5, window_bounds = array<i64: 8, 16>}]} {
    %c0 = arith.constant 0 : index
    %c0_0 = arith.constant 0 : index
    %0 = vector.load %arg1[%c0, %c0_0] : memref<16x64xf32, #tpu.memory_space<vmem>>, vector<16x64xf32>
    %c0_1 = arith.constant 0 : index
    %c0_2 = arith.constant 0 : index
    %1 = vector.load %arg2[%c0_1, %c0_2] : memref<64x128xf32, #tpu.memory_space<vmem>>, vector<64x128xf32>
    %cst = arith.constant dense<0.000000e+00> : vector<16x128xf32>
    %2 = tpu.matmul %0, %1, %cst {dimension_numbers = #tpu.dot_dimension_numbers<[1], [0], [0], [1], [0, 0, 1, 1], [], []>} : vector<16x64xf32>, vector<64x128xf32>, vector<16x128xf32> -> vector<16x128xf32>
    %c0_3 = arith.constant 0 : index
    %c0_4 = arith.constant 0 : index
    %3 = vector.load %arg3[%c0_3, %c0_4] : memref<1x128xf32, #tpu.memory_space<vmem>>, vector<1x128xf32>
    %4 = vector.broadcast %3 : vector<1x128xf32> to vector<16x128xf32>
    %5 = arith.addf %2, %4 : vector<16x128xf32>
    %cst_5 = arith.constant 0.000000e+00 : f32
    %6 = vector.broadcast %cst_5 : f32 to vector<16x128xf32>
    %7 = arith.maximumf %5, %6 : vector<16x128xf32>
    %c0_6 = arith.constant 0 : index
    %c0_7 = arith.constant 0 : index
    %8 = vector.load %arg4[%c0_6, %c0_7] : memref<8x128xf32, #tpu.memory_space<vmem>>, vector<8x128xf32>
    %cst_8 = arith.constant dense<0.000000e+00> : vector<8x16xf32>
    %9 = tpu.matmul %8, %7, %cst_8 {dimension_numbers = #tpu.dot_dimension_numbers<[1], [1], [0], [0], [0, 0, 1, 0], [], []>} : vector<8x128xf32>, vector<16x128xf32>, vector<8x16xf32> -> vector<8x16xf32>
    %c0_9 = arith.constant 0 : index
    %c0_10 = arith.constant 0 : index
    %10 = vector.load %arg5[%c0_9, %c0_10] : memref<8x1xf32, #tpu.memory_space<vmem>>, vector<8x1xf32>
    %11 = vector.broadcast %10 : vector<8x1xf32> to vector<8x16xf32>
    %12 = arith.addf %9, %11 : vector<8x16xf32>
    %cst_11 = arith.constant 0.000000e+00 : f32
    %13 = vector.broadcast %cst_11 : f32 to vector<8x16xf32>
    %14 = arith.subf %13, %12 : vector<8x16xf32>
    %15 = math.exp %14 : vector<8x16xf32>
    %cst_12 = arith.constant 1.000000e+00 : f32
    %16 = vector.broadcast %cst_12 : f32 to vector<8x16xf32>
    %17 = arith.addf %16, %15 : vector<8x16xf32>
    %cst_13 = arith.constant 1.000000e+00 : f32
    %18 = vector.broadcast %cst_13 : f32 to vector<8x16xf32>
    %19 = arith.divf %18, %17 : vector<8x16xf32>
    %c0_14 = arith.constant 0 : index
    %c0_15 = arith.constant 0 : index
    %20 = vector.load %arg6[%c0_14, %c0_15] : memref<8x16xf32, #tpu.memory_space<vmem>>, vector<8x16xf32>
    tpu.vector_store %arg6[%c0_14, %c0_15], %19 {strides = array<i32>} : memref<8x16xf32, #tpu.memory_space<vmem>>, vector<8x16xf32>,
    return
  }
  func.func @transform_0(%arg0: i32) -> (i32, i32) {
    %c0_i32 = arith.constant 0 : i32
    %c0_i32_0 = arith.constant 0 : i32
    return %arg0, %c0_i32 : i32, i32
  }
  func.func @transform_1(%arg0: i32) -> (i32, i32) {
    %c0_i32 = arith.constant 0 : i32
    %c0_i32_0 = arith.constant 0 : i32
    %c0_i32_1 = arith.constant 0 : i32
    return %c0_i32, %c0_i32_0 : i32, i32
  }
  func.func @transform_2(%arg0: i32) -> (i32, i32) {
    %c0_i32 = arith.constant 0 : i32
    %c0_i32_0 = arith.constant 0 : i32
    %c0_i32_1 = arith.constant 0 : i32
    return %c0_i32, %c0_i32_0 : i32, i32
  }
  func.func @transform_3(%arg0: i32) -> (i32, i32) {
    %c0_i32 = arith.constant 0 : i32
    %c0_i32_0 = arith.constant 0 : i32
    %c0_i32_1 = arith.constant 0 : i32
    return %c0_i32, %c0_i32_0 : i32, i32
  }
  func.func @transform_4(%arg0: i32) -> (i32, i32) {
    %c0_i32 = arith.constant 0 : i32
    %c0_i32_0 = arith.constant 0 : i32
    %c0_i32_1 = arith.constant 0 : i32
    return %c0_i32, %c0_i32_0 : i32, i32
  }
  func.func @transform_5(%arg0: i32) -> (i32, i32) {
    %c0_i32 = arith.constant 0 : i32
    %c0_i32_0 = arith.constant 0 : i32
    return %c0_i32, %arg0 : i32, i32
  }
}

</mosaic_0001>

<llo_original>
// kernel: squeeze.1
$region0: #{squeeze.1}
  %s0 = inlined_call_operand.vmem [shape: f32[16], index: 0, kind: input, shape index: {}]
  %s1 = inlined_call_operand.hbm [shape: f32[2,8,1], index: 1, kind: output, shape index: {}]
  $region1: #{squeeze.1} parent=0
    #allocation0 [shape = 'u8[1024]{0}', space=vmem, size = 0x400, scoped, tag = 'operand span for operand 1']
    #allocation1 [shape = 's32[1]{0}', space=sflag, size = 0x4, scoped, tag = 'scoped memory for squeeze.1']
    #allocation2 [shape = 'u8[4096]{0}', space=vmem, size = 0x1000, scoped, tag = 'scoped mem for output reshape']
    #allocation3 [shape = 'u8[4096]{0}', space=vmem, size = 0x1000, scoped, tag = 'scoped mem for input reshape']
    %2 = vsyncpa [#allocation1], 0
    %s4 = sshllo.u32 0, 1
    %v5 = vld [vmem:[%s0] sm:%s4]
    %6 = vst [vmem:[#allocation3] sm:%s4] %v5
    %v7 = vld [vmem:[#allocation3] sm:$0x1]
    %vm8 = vcmask 64512
    %9 = vst.msk [vmem:[#allocation2] sm:$0x1] %vm8, %v7
    %v10 = vld [vmem:[#allocation3] sm:$0x1]
    %11 = vrot.lane.b32.xlu0 %v10, 120
    %v12 = vpop.permute.xlu0 %11
    %vm13 = vcmask 64512
    %s14 = scalar_lea.vmem [#allocation2], 1
    %15 = vst.msk [vmem:[%s14] sm:$0x1] %vm13, %v12
    %s17 = sshllo.u32 0, 2
    %v19 = vld [vmem:[#allocation2] sm:%s17]
    %s20 = sshllo.u32 0, 2
    %21 = vst [vmem:[#allocation0] sm:%s20] %v19
    %s23 = ssub.s32 32, 32
    %24 = vsyncadd [#allocation1], %s23
    %s26 = sshll.u32 [#allocation0], 4
    %s27 = int_to_ptr.vmem [resolvable:$true] %s26
    %29 = dma.vmem_to_hbm [thread:$0]  %s27, 32, %s1, [#allocation1]
    %30 = dma.done [#allocation1], 32
    %31 = vsyncpa [#allocation1], 1

// kernel: aggregation_forward.1
$region0: #{aggregation_forward.1}
  #allocation0 [shape = 'u32[]', space=smem, size = 0x4, offset = 0x4, fixed_abs, tag = 'smem constant byte address 0x4 - core index']
  #allocation1 [shape = 'u32[144,128]{1,0:T(1,128)}', space=vmem, size = 0x12000, scoped, tag = 'internal scratch']
  %s0 = inlined_call_operand.hbm [shape: f32[16,64], index: 0, kind: input, shape index: {}]
  %s1 = inlined_call_operand.hbm [shape: f32[64,128], index: 1, kind: input, shape index: {}]
  %s2 = inlined_call_operand.vmem [shape: f32[1,128], index: 2, kind: input, shape index: {}]
  %s3 = inlined_call_operand.vmem [shape: f32[8,128], index: 3, kind: input, shape index: {}]
  %s4 = inlined_call_operand.vmem [shape: f32[8,1], index: 4, kind: input, shape index: {}]
  %s5 = inlined_call_operand.vmem [shape: f32[8,16], index: 5, kind: output, shape index: {}]
  %s6 = sld [smem:[#allocation0]]
  $region38: #{aggregation_forward.1} parent=0
    _
  %s8 = ssub.s32 1, %s6
  %s9 = scalar_select 0, %s8, %s6
  $region1: #{aggregation_forward.1} parent=0
    #allocation2 [shape = 'u8[8192]{0}', space=vmem, size = 0x2000, scoped, tag = 'input window, operand 0, single buffered']
    #allocation3 [shape = 's32[1]{0}', space=sflag, size = 0x4, scoped, tag = 'scoped memory for aggregation_forward.1']
    #allocation4 [shape = 'u8[32768]{0}', space=vmem, size = 0x8000, scoped, tag = 'input window, operand 1, single buffered']
    #allocation5 [shape = 's32[1]{0}', space=sflag, size = 0x4, scoped, tag = 'scoped memory for aggregation_forward.1']
    %10 = vsyncpa [#allocation3], 0
    %11 = vsyncpa [#allocation5], 0
    // Predicated region
    $region2: #{aggregation_forward.1} parent=1 // pred_check
      _
    $region3: #{aggregation_forward.1} parent=1 // pred_check_branch
      %13 = sbr.rel (0) target = $region5
    $region4: #{aggregation_forward.1} parent=1 // pred_region
      %s15 = ssub.s32 256, 256
      %16 = vsyncadd [#allocation3], %s15
      %s17 = sshll.u32 [#allocation2], 4
      %s18 = int_to_ptr.vmem [resolvable:$true] %s17
      %23 = dma.hbm_to_vmem [thread:$0]  %s0, 256, %s18, [#allocation3], 128, 128, 8
    $region5: #{aggregation_forward.1} parent=1 // pred_fallthru
      _
    // Predicated region
    $region6: #{aggregation_forward.1} parent=1 // pred_check
      _
    $region7: #{aggregation_forward.1} parent=1 // pred_check_branch
      %25 = sbr.rel (0) target = $region9
    $region8: #{aggregation_forward.1} parent=1 // pred_region
      %s27 = ssub.s32 1024, 1024
      %28 = vsyncadd [#allocation5], %s27
      %s29 = sshll.u32 [#allocation4], 4
      %s30 = int_to_ptr.vmem [resolvable:$true] %s29
      %35 = dma.hbm_to_vmem [thread:$0]  %s1, 1024, %s30, [#allocation5], 128, 128, 8
    $region9: #{aggregation_forward.1} parent=1 // pred_fallthru
      _
    // Predicated region
    $region10: #{aggregation_forward.1} parent=1 // pred_check
      _
    $region11: #{aggregation_forward.1} parent=1 // pred_check_branch
      %37 = sbr.rel (0) target = $region13
    $region12: #{aggregation_forward.1} parent=1 // pred_region
      _
    $region13: #{aggregation_forward.1} parent=1 // pred_fallthru
      _
    // Predicated region
    $region14: #{aggregation_forward.1} parent=1 // pred_check
      _
    $region15: #{aggregation_forward.1} parent=1 // pred_check_branch
      %39 = sbr.rel (0) target = $region17
    $region16: #{aggregation_forward.1} parent=1 // pred_region
      _
    $region17: #{aggregation_forward.1} parent=1 // pred_fallthru
      _
    // Predicated region
    $region18: #{aggregation_forward.1} parent=1 // pred_check
      _
    $region19: #{aggregation_forward.1} parent=1 // pred_check_branch
      %41 = sbr.rel (0) target = $region21
    $region20: #{aggregation_forward.1} parent=1 // pred_region
      _
    $region21: #{aggregation_forward.1} parent=1 // pred_fallthru
      _
    // Predicated region
    $region22: #{aggregation_forward.1} parent=1 // pred_check
      _
    $region23: #{aggregation_forward.1} parent=1 // pred_check_branch
      %43 = sbr.rel (0) target = $region25
    $region24: #{aggregation_forward.1} parent=1 // pred_region
      %44 = dma.done [#allocation3], 256
    $region25: #{aggregation_forward.1} parent=1 // pred_fallthru
      _
    // Predicated region
    $region26: #{aggregation_forward.1} parent=1 // pred_check
      _
    $region27: #{aggregation_forward.1} parent=1 // pred_check_branch
      %46 = sbr.rel (0) target = $region29
    $region28: #{aggregation_forward.1} parent=1 // pred_region
      %47 = dma.done [#allocation5], 1024
    $region29: #{aggregation_forward.1} parent=1 // pred_fallthru
      _
    %v48 = vld [vmem:[#allocation2] sm:$0xff]
    %v49 = vld [vmem:[#allocation2 + $0x8] sm:$0xff]
    %v50 = vld [vmem:[#allocation4] sm:$0xff]
    %v51 = vld [vmem:[#allocation4 + $0x8] sm:$0xff]
    %v52 = vld [vmem:[#allocation4 + $0x10] sm:$0xff]
    %v53 = vld [vmem:[#allocation4 + $0x18] sm:$0xff]
    %v54 = vld [vmem:[#allocation4 + $0x20] sm:$0xff]
    %v55 = vld [vmem:[#allocation4 + $0x28] sm:$0xff]
    %v56 = vld [vmem:[#allocation4 + $0x30] sm:$0xff]
    %v57 = vld [vmem:[#allocation4 + $0x38] sm:$0xff]
    %v58 = vld [vmem:[%s2] sm:$0x1]
    %v60 = vlaneseq
    %v61 = vshrl.u32 %v60, 7
    %v62 = vsub.s32 0, %v61
    %v63 = vrot.slane %v58, %v62
    %vm65 = vcmask 523264
    %v67 = vsel %vm65, %v48, 0
    %v70 = vsel %vm65, %v49, 0
    %72 = vmatprep.subr.mxu0 0.0
    %73 = vmatpush1.msra.mxu0 %v50
    %74 = vmatprep.subr.mxu0 0.0
    %75 = vmatpush1.msra.mxu0 %v51
    %76 = vmatprep.subr.mxu0 0.0
    %77 = vmatpush1.msra.mxu0 %v52
    %78 = vmatprep.subr.mxu0 0.0
    %79 = vmatpush1.msra.mxu0 %v53
    %80 = vmatprep.subr.mxu0 0.0
    %81 = vmatpush1.msra.mxu0 %v54
    %82 = vmatprep.subr.mxu0 0.0
    %83 = vmatpush1.msra.mxu0 %v55
    %84 = vmatprep.subr.mxu0 0.0
    %85 = vmatpush1.msra.mxu0 %v56
    %86 = vmatprep.subr.mxu0 0.0
    %87 = vmatpush1.msra.mxu0 %v57
    %88 = vmatprep.subr.mxu0 0.0
    %89 = vmatpush1.msra.mxu0 0.0
    %90 = vmatprep.subr.mxu0 0.0
    %91 = vmatpush1.msra.mxu0 0.0
    %92 = vmatprep.subr.mxu0 0.0
    %93 = vmatpush1.msra.mxu0 0.0
    %94 = vmatprep.subr.mxu0 0.0
    %95 = vmatpush1.msra.mxu0 0.0
    %96 = vmatprep.subr.mxu0 0.0
    %97 = vmatpush1.msra.mxu0 0.0
    %98 = vmatprep.subr.mxu0 0.0
    %99 = vmatpush1.msra.mxu0 0.0
    %100 = vmatprep.subr.mxu0 0.0
    %101 = vmatpush1.msra.mxu0 0.0
    %102 = vmatprep.subr.mxu0 0.0
    %103 = vmatpush1.msra.mxu0 0.0
    %104 = vmatprep.subr.mxu0 0.0
    %105 = vmatpush1.msra.mxu0 0.0
    %106 = vmatprep.subr.mxu0 0.0
    %107 = vmatpush1.msra.mxu0 0.0
    %108 = vmatprep.subr.mxu0 0.0
    %109 = vmatpush1.msra.mxu0 0.0
    %110 = vmatprep.subr.mxu0 0.0
    %111 = vmatpush1.msra.mxu0 0.0
    %112 = vmatprep.subr.mxu0 0.0
    %113 = vmatpush1.msra.mxu0 0.0
    %114 = vmatprep.subr.mxu0 0.0
    %115 = vmatpush1.msra.mxu0 0.0
    %116 = vmatprep.subr.mxu0 0.0
    %117 = vmatpush1.msra.mxu0 0.0
    %118 = vmatprep.subr.mxu0 0.0
    %119 = vmatpush1.msra.mxu0 0.0
    %120 = vmatprep.subr.mxu0 0.0
    %121 = vmatpush1.msra.mxu0 0.0
    %122 = vmatprep.subr.mxu0 0.0
    %123 = vmatpush1.msra.mxu0 0.0
    %124 = vmatprep.subr.mxu0 0.0
    %125 = vmatpush1.msra.mxu0 0.0
    %126 = vmatprep.subr.mxu0 0.0
    %127 = vmatpush1.msra.mxu0 0.0
    %128 = vmatprep.subr.mxu0 0.0
    %129 = vmatpush1.msra.mxu0 0.0
    %130 = vmatprep.subr.mxu0 0.0
    %131 = vmatpush1.msra.mxu0 0.0
    %132 = vmatprep.subr.mxu0 0.0
    %133 = vmatpush1.msra.mxu0 0.0
    %134 = vmatprep.subr.mxu0 0.0
    %135 = vmatpush1.msra.mxu0 0.0
    %136 = vmatprep.mubr.f32.mxu0 0.0
    %137 = vmatmul.mubr.f32.gmra.mrb[0].mxu0 %v67
    %v138 = vpop.f32.mrb[0].mxu0
    %v139 = vadd.f32 %v63, %v138
    %v140 = vpop.f32.mrb[0].mxu0
    %141 = vmatprep.mubr.f32.mxu0 0.0
    %142 = vmatmul.mubr.f32.gmra.mrb[0].mxu0 %v70
    %v143 = vpop.f32.mrb[0].mxu0
    %v144 = vadd.f32 %v63, %v143
    %v145 = vpop.f32.mrb[0].mxu0
    %146 = vdwg.mxu0
    %v147 = vmax.f32 %v139, 0.0
    %v148 = vmax.f32 %v144, 0.0
    %v149 = vld [vmem:[%s3] sm:$0xff]
    %v150 = vld [vmem:[%s4] sm:$0xff]
    %152 = vset.pattern.permute.xlu0 0
    %153 = vperm.xlu0 %152, %v150
    %v154 = vpop.permute.xlu0 %153
    %156 = vmatprep.subr.mxu0 0.0
    %157 = vmatpush1.xpose.msra.mxu0 %v147
    %158 = vmatprep.subr.mxu0 0.0
    %159 = vmatpush1.xpose.msra.mxu0 %v148
    %160 = vmatprep.subr.mxu0 0.0
    %161 = vmatpush1.xpose.msra.mxu0 0.0
    %162 = vmatprep.subr.mxu0 0.0
    %163 = vmatpush1.xpose.msra.mxu0 0.0
    %164 = vmatprep.subr.mxu0 0.0
    %165 = vmatpush1.xpose.msra.mxu0 0.0
    %166 = vmatprep.subr.mxu0 0.0
    %167 = vmatpush1.xpose.msra.mxu0 0.0
    %168 = vmatprep.subr.mxu0 0.0
    %169 = vmatpush1.xpose.msra.mxu0 0.0
    %170 = vmatprep.subr.mxu0 0.0
    %171 = vmatpush1.xpose.msra.mxu0 0.0
    %172 = vmatprep.subr.mxu0 0.0
    %173 = vmatpush1.xpose.msra.mxu0 0.0
    %174 = vmatprep.subr.mxu0 0.0
    %175 = vmatpush1.xpose.msra.mxu0 0.0
    %176 = vmatprep.subr.mxu0 0.0
    %177 = vmatpush1.xpose.msra.mxu0 0.0
    %178 = vmatprep.subr.mxu0 0.0
    %179 = vmatpush1.xpose.msra.mxu0 0.0
    %180 = vmatprep.subr.mxu0 0.0
    %181 = vmatpush1.xpose.msra.mxu0 0.0
    %182 = vmatprep.subr.mxu0 0.0
    %183 = vmatpush1.xpose.msra.mxu0 0.0
    %184 = vmatprep.subr.mxu0 0.0
    %185 = vmatpush1.xpose.msra.mxu0 0.0
    %186 = vmatprep.subr.mxu0 0.0
    %187 = vmatpush1.xpose.msra.mxu0 0.0
    %188 = vmatprep.subr.mxu0 0.0
    %189 = vmatpush1.xpose.msra.mxu0 0.0
    %190 = vmatprep.subr.mxu0 0.0
    %191 = vmatpush1.xpose.msra.mxu0 0.0
    %192 = vmatprep.subr.mxu0 0.0
    %193 = vmatpush1.xpose.msra.mxu0 0.0
    %194 = vmatprep.subr.mxu0 0.0
    %195 = vmatpush1.xpose.msra.mxu0 0.0
    %196 = vmatprep.subr.mxu0 0.0
    %197 = vmatpush1.xpose.msra.mxu0 0.0
    %198 = vmatprep.subr.mxu0 0.0
    %199 = vmatpush1.xpose.msra.mxu0 0.0
    %200 = vmatprep.subr.mxu0 0.0
    %201 = vmatpush1.xpose.msra.mxu0 0.0
    %202 = vmatprep.subr.mxu0 0.0
    %203 = vmatpush1.xpose.msra.mxu0 0.0
    %204 = vmatprep.subr.mxu0 0.0
    %205 = vmatpush1.xpose.msra.mxu0 0.0
    %206 = vmatprep.subr.mxu0 0.0
    %207 = vmatpush1.xpose.msra.mxu0 0.0
    %208 = vmatprep.subr.mxu0 0.0
    %209 = vmatpush1.xpose.msra.mxu0 0.0
    %210 = vmatprep.subr.mxu0 0.0
    %211 = vmatpush1.xpose.msra.mxu0 0.0
    %212 = vmatprep.subr.mxu0 0.0
    %213 = vmatpush1.xpose.msra.mxu0 0.0
    %214 = vmatprep.subr.mxu0 0.0
    %215 = vmatpush1.xpose.msra.mxu0 0.0
    %216 = vmatprep.subr.mxu0 0.0
    %217 = vmatpush1.xpose.msra.mxu0 0.0
    %218 = vmatprep.subr.mxu0 0.0
    %219 = vmatpush1.xpose.msra.mxu0 0.0
    %220 = vmatprep.mubr.f32.mxu0 0.0
    %221 = vmatmul.mubr.f32.gmra.mrb[0].mxu0 %v149
    %v222 = vpop.f32.mrb[0].mxu0
    %v223 = vadd.f32 %v154, %v222
    %v224 = vpop.f32.mrb[0].mxu0
    %225 = vdwg.mxu0
    %v226 = vsub.f32 0.0, %v223
    %v227 = vmul.f32 %v226, 1.442695
    %v228 = vpow.pop %v227
    %v229 = vadd.f32 %v228, 1.0
    %v230 = vrcp.pop %v229
    %v231 = vmul.f32 1.0, %v230
    %vm232 = vcmask 130048
    %233 = vst.msk [vmem:[%s5] sm:$0xff] %vm232, %v231
    // Predicated region
    $region30: #{aggregation_forward.1} parent=1 // pred_check
      _
    $region31: #{aggregation_forward.1} parent=1 // pred_check_branch
      %235 = sbr.rel (0) target = $region33
    $region32: #{aggregation_forward.1} parent=1 // pred_region
      _
    $region33: #{aggregation_forward.1} parent=1 // pred_fallthru
      _
    // Predicated region
    $region34: #{aggregation_forward.1} parent=1 // pred_check
      _
    $region35: #{aggregation_forward.1} parent=1 // pred_check_branch
      %237 = sbr.rel (0) target = $region37
    $region36: #{aggregation_forward.1} parent=1 // pred_region
      _
    $region37: #{aggregation_forward.1} parent=1 // pred_fallthru
      _
    %238 = vsyncpa [#allocation3], 1
    %239 = vsyncpa [#allocation5], 1

</llo_original>
